<compile_context>
chip_gen: v7x
topology: tpu7x:2x2x1
jax: 0.10.0
libtpu: 0.0.40
codegen_flags: <defaults>
</compile_context>

<pallas_src>
import math

import jax
import jax.numpy as jnp
import numpy as np
from jax.experimental import pallas as pl
from jax.experimental.pallas import tpu as pltpu


# ----------------------------------------------------------------------------
# Tiling configuration
# ----------------------------------------------------------------------------
_LANE = 1024              # lane-dense tile width (multiple of 128)
_MAX_BLOCK_ROWS = 256     # 256 x 1024 x 4B = 1 MiB per f32 tile
_MIN_PALLAS_ELEMS = 4096  # below this, a pallas_call's launch overhead dominates


def _round_up(x, m):
    return ((x + m - 1) // m) * m


# ----------------------------------------------------------------------------
# Pallas kernels (elementwise on a (block_rows, _LANE) tile)
# ----------------------------------------------------------------------------
def _add_linear_kernel(params_ref, ce_ref, exp_ref, out_ref):
    # params (SMEM): [ref_value, lambda/ref_value, alpha]  (divide folded host-side)
    ref_value = params_ref[0]
    k = params_ref[1]
    alpha = params_ref[2]
    ce = ce_ref[...].astype(jnp.float32)
    expl = exp_ref[...].astype(jnp.float32)
    reg_loss = ce + (expl - ref_value) * k
    out_ref[...] = (reg_loss * ce * alpha).astype(out_ref.dtype)


def _mul_log_kernel(params_ref, ce_ref, exp_ref, out_ref):
    # params (SMEM): [1/log(ref_value), beta, alpha]  (log(ref) folded host-side)
    inv_log_ref = params_ref[0]
    beta = params_ref[1]
    alpha = params_ref[2]
    ce = ce_ref[...].astype(jnp.float32)
    expl = exp_ref[...].astype(jnp.float32)
    # (log(exp)/log(ref)) ** beta written as exp(beta*log(ratio)):
    # 3 EUP transcendentals per element (log, log, exp), no vector divide.
    # NaN for ratio <= 0 (expected_loss <= 1 when ref > 1), matching torch
    # float-pow semantics for a negative base with non-integer exponent.
    ratio = jnp.log(expl) * inv_log_ref
    reg_loss = jnp.exp(beta * jnp.log(ratio))
    out_ref[...] = (alpha * ce * reg_loss).astype(out_ref.dtype)


# ----------------------------------------------------------------------------
# pallas_call wrapper: flatten -> pad -> (rows, LANE) tiles -> grid over rows
# ----------------------------------------------------------------------------
def _call_elementwise(kernel, params, ce2d, exp2d, block_rows, lane):
    rows = ce2d.shape[0]
    grid = (rows // block_rows,)
    # index_map receives the scalar-prefetch ref as a trailing positional arg.
    tile_spec = pl.BlockSpec((block_rows, lane), lambda i, params_smem: (i, 0))
    return pl.pallas_call(
        kernel,
        out_shape=jax.ShapeDtypeStruct(ce2d.shape, ce2d.dtype),
        grid_spec=pltpu.PrefetchScalarGridSpec(
            num_scalar_prefetch=1,                # params -> SMEM
            grid=grid,
            in_specs=[tile_spec, tile_spec],
            out_specs=tile_spec,
        ),
        compiler_params=pltpu.CompilerParams(
            dimension_semantics=("parallel",),    # shard grid across TCs on v7x
            vmem_limit_bytes=32 * 1024 * 1024,    # headroom; usage is ~6 MiB
        ),
        # NOTE: input_output_aliases={1: 0} (alias ce -> out) is a free HBM
        # saving when the caller donates ce_loss; left off to keep semantics.
    )(params, ce2d, exp2d)


def _run_pallas(kernel, params, ce_loss, expected_loss):
    orig_shape = jnp.shape(ce_loss)
    n = math.prod(orig_shape) if orig_shape else 1

    lane = _LANE
    rows = -(-n // lane)  # ceil
    if rows >= _MAX_BLOCK_ROWS:
        block_rows = _MAX_BLOCK_ROWS
    else:
        block_rows = _round_up(rows, 8)
    rows_padded = _round_up(rows, block_rows)
    n_padded = rows_padded * lane

    ce_flat = jnp.reshape(ce_loss, (-1,))
    ex_flat = jnp.reshape(expected_loss, (-1,))
    if n_padded != n:
        pad = n_padded - n
        # Pad with 1.0 so log() stays finite in the (discarded) padded region.
        ce_flat = jnp.pad(ce_flat, (0, pad), constant_values=1.0)
        ex_flat = jnp.pad(ex_flat, (0, pad), constant_values=1.0)
    ce2d = ce_flat.reshape(rows_padded, lane)
    ex2d = ex_flat.reshape(rows_padded, lane)

    out2d = _call_elementwise(kernel, params, ce2d, ex2d, block_rows, lane)
    return out2d.reshape(-1)[:n].reshape(orig_shape)


# ----------------------------------------------------------------------------
# Pure-JAX formulas (used for the tiny-input bypass and as references)
# ----------------------------------------------------------------------------
def _jnp_add_linear(ce, expl, cfg):
    reg = ce + (expl - cfg.ref_value) * cfg.grad_reg_loss_lambda / cfg.ref_value
    return reg * ce * cfg.grad_reg_loss_alpha


def _jnp_mul_log(ce, expl, cfg):
    reg = (jnp.log(expl) / math.log(cfg.ref_value)) ** cfg.grad_reg_loss_beta
    return cfg.grad_reg_loss_alpha * ce * reg


# ----------------------------------------------------------------------------
# Module-equivalent wrapper (glue in plain Python/JAX)
# ----------------------------------------------------------------------------
class Config:
    def __init__(self, grad_reg_loss_type, ref_value=100.0,
                 grad_reg_loss_lambda=0.1, grad_reg_loss_alpha=0.2,
                 grad_reg_loss_beta=0.6):
        self.grad_reg_loss_type = grad_reg_loss_type
        self.ref_value = ref_value
        self.grad_reg_loss_lambda = grad_reg_loss_lambda
        self.grad_reg_loss_alpha = grad_reg_loss_alpha
        self.grad_reg_loss_beta = grad_reg_loss_beta


class LatencyLoss:
    def __init__(self, config, channels, strides, input_size=112):
        self.channels = channels
        self.strides = strides
        self.config = config
        self._calculate_feature_map_size(input_size)
        self._load_latency()

    def _load_latency(self):
        # TODO(synk): original module reads a latency.csv lookup table; we
        # synthesize a deterministic in-memory table instead (no file I/O).
        self._latency = {
            '224x224x3-112x112x32-stride:2': '1.0',
            '112x112x32-112x112x16-expand:1-kernel:3-stride:1': '2.0',
            '7x7x1280-1000': '3.0',
        }

    def _calculate_feature_map_size(self, input_size):
        self.feature_maps = [input_size]
        for s in self.strides[:-1]:
            input_size = input_size // s
            self.feature_maps.append(input_size)

    def forward(self, ce_loss, expected_loss, config):
        if expected_loss is None:
            return ce_loss
        loss_type = config.grad_reg_loss_type
        if loss_type is None:
            return ce_loss

        n = math.prod(jnp.shape(ce_loss)) if jnp.shape(ce_loss) else 1

        if loss_type == 'add#linear':
            if n < _MIN_PALLAS_ELEMS:
                # Tiny / scalar losses: Pallas launch overhead dominates.
                return _jnp_add_linear(ce_loss, expected_loss, config)
            params = jnp.array(
                [config.ref_value,
                 config.grad_reg_loss_lambda / config.ref_value,   # folded divide
                 config.grad_reg_loss_alpha], dtype=jnp.float32)
            return _run_pallas(_add_linear_kernel, params, ce_loss, expected_loss)
        elif loss_type == 'mul#log':
            if n < _MIN_PALLAS_ELEMS:
                return _jnp_mul_log(ce_loss, expected_loss, config)
            params = jnp.array(
                [1.0 / math.log(config.ref_value),                 # folded log(ref)
                 config.grad_reg_loss_beta,
                 config.grad_reg_loss_alpha], dtype=jnp.float32)
            return _run_pallas(_mul_log_kernel, params, ce_loss, expected_loss)
        else:
            raise ValueError('Do not support: %s' % loss_type)


# ----------------------------------------------------------------------------
# Test / demo
# ----------------------------------------------------------------------------
if __name__ == "__main__":
    key = jax.random.PRNGKey(0)
    k1, k2, k3, k4 = jax.random.split(key, 4)

    channels = [16, 24, 32, 64, 96, 160, 320]
    strides = [1, 2, 2, 2, 1, 2]

    cfg_lin = Config('add#linear')
    cfg_log = Config('mul#log')
    cfg_none = Config(None)
    mod = LatencyLoss(cfg_lin, channels, strides, input_size=112)

    # --- small lane-dense tensor (single-block grid, Pallas path) ----------
    shape_small = (8, 1024)
    ce_s = jax.random.uniform(k1, shape_small, jnp.float32, minval=0.5, maxval=2.5)
    ex_s = jax.random.uniform(k2, shape_small, jnp.float32, minval=50.0, maxval=150.0)

    out = jax.block_until_ready(mod.forward(ce_s, ex_s, cfg_lin))
    np.testing.assert_allclose(np.asarray(out),
                               np.asarray(_jnp_add_linear(ce_s, ex_s, cfg_lin)),
                               rtol=1e-5, atol=1e-5)

    out = jax.block_until_ready(mod.forward(ce_s, ex_s, cfg_log))
    np.testing.assert_allclose(np.asarray(out),
                               np.asarray(_jnp_mul_log(ce_s, ex_s, cfg_log)),
                               rtol=1e-4, atol=1e-5)

    # --- ragged shape: exercises padding + multi-step parallel grid --------
    shape_big = (520, 520)
    ce_b = jax.random.uniform(k3, shape_big, jnp.float32, minval=0.5, maxval=2.5)
    ex_b = jax.random.uniform(k4, shape_big, jnp.float32, minval=50.0, maxval=150.0)

    out = jax.block_until_ready(mod.forward(ce_b, ex_b, cfg_lin))
    np.testing.assert_allclose(np.asarray(out),
                               np.asarray(_jnp_add_linear(ce_b, ex_b, cfg_lin)),
                               rtol=1e-5, atol=1e-5)

    out = jax.block_until_ready(mod.forward(ce_b, ex_b, cfg_log))
    np.testing.assert_allclose(np.asarray(out),
                               np.asarray(_jnp_mul_log(ce_b, ex_b, cfg_log)),
                               rtol=1e-4, atol=1e-5)

    # --- tiny losses take the plain-XLA bypass ------------------------------
    ce_t = jnp.array([1.3, 0.9, 2.1, 1.7], jnp.float32)
    ex_t = jnp.array([80.0, 120.0, 95.0, 101.0], jnp.float32)
    out = jax.block_until_ready(mod.forward(ce_t, ex_t, cfg_lin))
    np.testing.assert_allclose(np.asarray(out),
                               np.asarray(_jnp_add_linear(ce_t, ex_t, cfg_lin)),
                               rtol=1e-5, atol=1e-6)

    # --- None branch / missing expected_loss: pass-through ------------------
    out_none = jax.block_until_ready(mod.forward(ce_s, None, cfg_none))
    np.testing.assert_allclose(np.asarray(out_none), np.asarray(ce_s))
    out_none2 = jax.block_until_ready(mod.forward(ce_s, ex_s, cfg_none))
    np.testing.assert_allclose(np.asarray(out_none2), np.asarray(ce_s))

    print("KERNEL_OK")
</pallas_src>

<mosaic_0001>
module attributes {stable_mosaic.version = 11 : i64} {
  func.func @_add_linear_kernel(%arg0: i32, %arg1: memref<3xf32, #tpu.memory_space<smem>>, %arg2: memref<8x1024xf32, #tpu.memory_space<vmem>>, %arg3: memref<8x1024xf32, #tpu.memory_space<vmem>>, %arg4: memref<8x1024xf32, #tpu.memory_space<vmem>>) attributes {dimension_semantics = [#tpu.dimension_semantics<parallel>], iteration_bounds = array<i64: 1>, scalar_prefetch = 1 : i64, scratch_operands = 0 : i64, tpu.core_type = #tpu.core_type<tc>, window_params = [{transform_indices = @transform_0, window_bounds = array<i64: 8, 1024>}, {transform_indices = @transform_1, window_bounds = array<i64: 8, 1024>}, {transform_indices = @transform_2, window_bounds = array<i64: 8, 1024>}]} {
    %c0 = arith.constant 0 : index
    %0 = memref.load %arg1[%c0] : memref<3xf32, #tpu.memory_space<smem>>
    %c1 = arith.constant 1 : index
    %1 = memref.load %arg1[%c1] : memref<3xf32, #tpu.memory_space<smem>>
    %c2 = arith.constant 2 : index
    %2 = memref.load %arg1[%c2] : memref<3xf32, #tpu.memory_space<smem>>
    %c0_0 = arith.constant 0 : index
    %c0_1 = arith.constant 0 : index
    %3 = vector.load %arg2[%c0_0, %c0_1] : memref<8x1024xf32, #tpu.memory_space<vmem>>, vector<8x1024xf32>
    %c0_2 = arith.constant 0 : index
    %c0_3 = arith.constant 0 : index
    %4 = vector.load %arg3[%c0_2, %c0_3] : memref<8x1024xf32, #tpu.memory_space<vmem>>, vector<8x1024xf32>
    %5 = vector.broadcast %0 : f32 to vector<8x1024xf32>
    %6 = arith.subf %4, %5 : vector<8x1024xf32>
    %7 = vector.broadcast %1 : f32 to vector<8x1024xf32>
    %8 = arith.mulf %6, %7 : vector<8x1024xf32>
    %9 = arith.addf %3, %8 : vector<8x1024xf32>
    %10 = arith.mulf %9, %3 : vector<8x1024xf32>
    %11 = vector.broadcast %2 : f32 to vector<8x1024xf32>
    %12 = arith.mulf %10, %11 : vector<8x1024xf32>
    %c0_4 = arith.constant 0 : index
    %c0_5 = arith.constant 0 : index
    %13 = vector.load %arg4[%c0_4, %c0_5] : memref<8x1024xf32, #tpu.memory_space<vmem>>, vector<8x1024xf32>
    tpu.vector_store %arg4[%c0_4, %c0_5], %12 {strides = array<i32>} : memref<8x1024xf32, #tpu.memory_space<vmem>>, vector<8x1024xf32>,
    return
  }
  func.func @transform_0(%arg0: i32, %arg1: memref<3xf32, #tpu.memory_space<smem>>) -> (i32, i32) {
    %c0_i32 = arith.constant 0 : i32
    %c0_i32_0 = arith.constant 0 : i32
    return %arg0, %c0_i32 : i32, i32
  }
  func.func @transform_1(%arg0: i32, %arg1: memref<3xf32, #tpu.memory_space<smem>>) -> (i32, i32) {
    %c0_i32 = arith.constant 0 : i32
    %c0_i32_0 = arith.constant 0 : i32
    return %arg0, %c0_i32 : i32, i32
  }
  func.func @transform_2(%arg0: i32, %arg1: memref<3xf32, #tpu.memory_space<smem>>) -> (i32, i32) {
    %c0_i32 = arith.constant 0 : i32
    %c0_i32_0 = arith.constant 0 : i32
    return %arg0, %c0_i32 : i32, i32
  }
}

</mosaic_0001>

<llo_original>
// kernel: tpu_custom_call.1
$region0: #{tpu_custom_call.1}
  #allocation0 [shape = 'u32[]', space=smem, size = 0x4, offset = 0x4, fixed_abs, tag = 'smem constant byte address 0x4 - core index']
  #allocation1 [shape = 'u32[144,128]{1,0:T(1,128)}', space=vmem, size = 0x12000, scoped, tag = 'internal scratch']
  #allocation2 [shape = 's32[1]{0}', space=sflag, size = 0x4, scoped, tag = 'scoped memory for tpu_custom_call.1']
  #allocation3 [shape = 'u8[512]{0}', space=smem, size = 0x200, scoped, tag = 'prefetched SMEM operand 0']
  %s0 = inlined_call_operand.hbm [shape: f32[3], index: 0, kind: input, shape index: {}]
  %s1 = inlined_call_operand.hbm [shape: f32[8,1024], index: 1, kind: input, shape index: {}]
  %s2 = inlined_call_operand.hbm [shape: f32[8,1024], index: 2, kind: input, shape index: {}]
  %s3 = inlined_call_operand.hbm [shape: f32[8,1024], index: 3, kind: output, shape index: {}]
  %s4 = sld [smem:[#allocation0]]
  $region26: #{tpu_custom_call.1} parent=0
    _
  %s6 = ssub.s32 1, %s4
  %s7 = scalar_select 0, %s6, %s4
  %9 = dma.hbm_to_smem %s0, 16, [#allocation3], [#allocation2]
  %10 = dma.done [#allocation2], 16
  %11 = sfence
  $region1: #{tpu_custom_call.1} parent=0
    #allocation4 [shape = 'u8[32768]{0}', space=vmem, size = 0x8000, scoped, tag = 'input window, operand 1, single buffered']
    #allocation5 [shape = 's32[1]{0}', space=sflag, size = 0x4, scoped, tag = 'scoped memory for tpu_custom_call.1']
    #allocation6 [shape = 's32[1]{0}', space=sflag, size = 0x4, scoped, tag = 'scoped memory for tpu_custom_call.1']
    #allocation7 [shape = 'u8[32768]{0}', space=vmem, size = 0x8000, scoped, tag = 'input window, operand 2, single buffered']
    #allocation8 [shape = 's32[1]{0}', space=sflag, size = 0x4, scoped, tag = 'scoped memory for tpu_custom_call.1']
    #allocation9 [shape = 'u8[32768]{0}', space=vmem, size = 0x8000, scoped, tag = 'output window, operand 0, single buffered']
    %12 = vsyncpa [#allocation5], 0
    %13 = vsyncpa [#allocation8], 0
    %14 = vsyncpa [#allocation6], 0
    // Predicated region
    $region2: #{tpu_custom_call.1} parent=1 // pred_check
      _
    $region3: #{tpu_custom_call.1} parent=1 // pred_check_branch
      %16 = sbr.rel (0) target = $region5
    $region4: #{tpu_custom_call.1} parent=1 // pred_region
      %s18 = ssub.s32 1024, 1024
      %19 = vsyncadd [#allocation5], %s18
      %s21 = sshll.u32 [#allocation4], 4
      %s22 = int_to_ptr.vmem [resolvable:$true] %s21
      %24 = dma.hbm_to_vmem [thread:$0]  %s1, 1024, %s22, [#allocation5]
    $region5: #{tpu_custom_call.1} parent=1 // pred_fallthru
      _
    // Predicated region
    $region6: #{tpu_custom_call.1} parent=1 // pred_check
      _
    $region7: #{tpu_custom_call.1} parent=1 // pred_check_branch
      %26 = sbr.rel (0) target = $region9
    $region8: #{tpu_custom_call.1} parent=1 // pred_region
      %s28 = ssub.s32 1024, 1024
      %29 = vsyncadd [#allocation8], %s28
      %s31 = sshll.u32 [#allocation7], 4
      %s32 = int_to_ptr.vmem [resolvable:$true] %s31
      %34 = dma.hbm_to_vmem [thread:$0]  %s2, 1024, %s32, [#allocation8]
    $region9: #{tpu_custom_call.1} parent=1 // pred_fallthru
      _
    // Predicated region
    $region10: #{tpu_custom_call.1} parent=1 // pred_check
      _
    $region11: #{tpu_custom_call.1} parent=1 // pred_check_branch
      %36 = sbr.rel (0) target = $region13
    $region12: #{tpu_custom_call.1} parent=1 // pred_region
      %37 = dma.done [#allocation5], 1024
    $region13: #{tpu_custom_call.1} parent=1 // pred_fallthru
      _
    // Predicated region
    $region14: #{tpu_custom_call.1} parent=1 // pred_check
      _
    $region15: #{tpu_custom_call.1} parent=1 // pred_check_branch
      %39 = sbr.rel (0) target = $region17
    $region16: #{tpu_custom_call.1} parent=1 // pred_region
      %40 = dma.done [#allocation8], 1024
    $region17: #{tpu_custom_call.1} parent=1 // pred_fallthru
      _
    %s41 = sld [smem:[#allocation3]]
    %s42 = sld [smem:[#allocation3 + $0x1]]
    %s43 = sld [smem:[#allocation3 + $0x2]]
    %v44 = vld [vmem:[#allocation4] sm:$0xff]
    %v45 = vld [vmem:[#allocation4 + $0x8] sm:$0xff]
    %v46 = vld [vmem:[#allocation4 + $0x10] sm:$0xff]
    %v47 = vld [vmem:[#allocation4 + $0x18] sm:$0xff]
    %v48 = vld [vmem:[#allocation4 + $0x20] sm:$0xff]
    %v49 = vld [vmem:[#allocation4 + $0x28] sm:$0xff]
    %v50 = vld [vmem:[#allocation4 + $0x30] sm:$0xff]
    %v51 = vld [vmem:[#allocation4 + $0x38] sm:$0xff]
    %v52 = vld [vmem:[#allocation7] sm:$0xff]
    %v53 = vld [vmem:[#allocation7 + $0x8] sm:$0xff]
    %v54 = vld [vmem:[#allocation7 + $0x10] sm:$0xff]
    %v55 = vld [vmem:[#allocation7 + $0x18] sm:$0xff]
    %v56 = vld [vmem:[#allocation7 + $0x20] sm:$0xff]
    %v57 = vld [vmem:[#allocation7 + $0x28] sm:$0xff]
    %v58 = vld [vmem:[#allocation7 + $0x30] sm:$0xff]
    %v59 = vld [vmem:[#allocation7 + $0x38] sm:$0xff]
    %v60 = vstv %s41
    %v61 = vsub.f32 %v52, %v60
    %v62 = vsub.f32 %v53, %v60
    %v63 = vsub.f32 %v54, %v60
    %v64 = vsub.f32 %v55, %v60
    %v65 = vsub.f32 %v56, %v60
    %v66 = vsub.f32 %v57, %v60
    %v67 = vsub.f32 %v58, %v60
    %v68 = vsub.f32 %v59, %v60
    %v69 = vstv %s42
    %v70 = vmul.f32 %v61, %v69
    %v71 = vmul.f32 %v62, %v69
    %v72 = vmul.f32 %v63, %v69
    %v73 = vmul.f32 %v64, %v69
    %v74 = vmul.f32 %v65, %v69
    %v75 = vmul.f32 %v66, %v69
    %v76 = vmul.f32 %v67, %v69
    %v77 = vmul.f32 %v68, %v69
    %v78 = vadd.f32 %v44, %v70
    %v79 = vadd.f32 %v45, %v71
    %v80 = vadd.f32 %v46, %v72
    %v81 = vadd.f32 %v47, %v73
    %v82 = vadd.f32 %v48, %v74
    %v83 = vadd.f32 %v49, %v75
    %v84 = vadd.f32 %v50, %v76
    %v85 = vadd.f32 %v51, %v77
    %v86 = vmul.f32 %v78, %v44
    %v87 = vmul.f32 %v79, %v45
    %v88 = vmul.f32 %v80, %v46
    %v89 = vmul.f32 %v81, %v47
    %v90 = vmul.f32 %v82, %v48
    %v91 = vmul.f32 %v83, %v49
    %v92 = vmul.f32 %v84, %v50
    %v93 = vmul.f32 %v85, %v51
    %v94 = vstv %s43
    %v95 = vmul.f32 %v86, %v94
    %v96 = vmul.f32 %v87, %v94
    %v97 = vmul.f32 %v88, %v94
    %v98 = vmul.f32 %v89, %v94
    %v99 = vmul.f32 %v90, %v94
    %v100 = vmul.f32 %v91, %v94
    %v101 = vmul.f32 %v92, %v94
    %v102 = vmul.f32 %v93, %v94
    %103 = vst [vmem:[#allocation9] sm:$0xff] %v95
    %104 = vst [vmem:[#allocation9 + $0x8] sm:$0xff] %v96
    %105 = vst [vmem:[#allocation9 + $0x10] sm:$0xff] %v97
    %106 = vst [vmem:[#allocation9 + $0x18] sm:$0xff] %v98
    %107 = vst [vmem:[#allocation9 + $0x20] sm:$0xff] %v99
    %108 = vst [vmem:[#allocation9 + $0x28] sm:$0xff] %v100
    %109 = vst [vmem:[#allocation9 + $0x30] sm:$0xff] %v101
    %110 = vst [vmem:[#allocation9 + $0x38] sm:$0xff] %v102
    // Predicated region
    $region18: #{tpu_custom_call.1} parent=1 // pred_check
      _
    $region19: #{tpu_custom_call.1} parent=1 // pred_check_branch
      %112 = sbr.rel (0) target = $region21
    $region20: #{tpu_custom_call.1} parent=1 // pred_region
      %s114 = ssub.s32 1024, 1024
      %115 = vsyncadd [#allocation6], %s114
      %s117 = sshll.u32 [#allocation9], 4
      %s118 = int_to_ptr.vmem [resolvable:$true] %s117
      %120 = dma.vmem_to_hbm [thread:$0]  %s118, 1024, %s3, [#allocation6]
    $region21: #{tpu_custom_call.1} parent=1 // pred_fallthru
      _
    // Predicated region
    $region22: #{tpu_custom_call.1} parent=1 // pred_check
      _
    $region23: #{tpu_custom_call.1} parent=1 // pred_check_branch
      %122 = sbr.rel (0) target = $region25
    $region24: #{tpu_custom_call.1} parent=1 // pred_region
      %123 = dma.done [#allocation6], 1024
    $region25: #{tpu_custom_call.1} parent=1 // pred_fallthru
      _
    %124 = vsyncpa [#allocation5], 1
    %125 = vsyncpa [#allocation8], 1
    %126 = vsyncpa [#allocation6], 1

</llo_original>
